<compile_context>
chip_gen: v7x
topology: tpu7x:2x2x1
jax: 0.10.0
libtpu: 0.0.40
codegen_flags: <defaults>
</compile_context>

<pallas_src>
import functools

import jax
import jax.numpy as jnp
from jax.experimental import pallas as pl
from jax.experimental.pallas import tpu as pltpu


def _round_up(a: int, b: int) -> int:
    return ((a + b - 1) // b) * b


def _graph_pool_kernel(batch_ref, x_ref, w_ref, b_ref, out_ref,
                       acc_ref, cnt_ref, *, n_nodes, compute_dtype):
    """One grid step over a node tile: accumulate segment-sum + counts; finalize on last."""
    step = pl.program_id(0)

    @pl.when(step == 0)
    def _init():
        acc_ref[...] = jnp.zeros_like(acc_ref)
        cnt_ref[...] = jnp.zeros_like(cnt_ref)

    b_pad = acc_ref.shape[0]
    tile_n = x_ref.shape[0]
    ragged = (n_nodes % tile_n) != 0            # static Python bool

    batch_ids = batch_ref[...]                  # [1, tile_n] int32
    x_tile = x_ref[...]                         # [tile_n, num_in] native dtype

    if ragged:
        # Mask the partial tail block: out-of-bounds rows/lanes hold HBM garbage.
        col = step * tile_n + jax.lax.broadcasted_iota(jnp.int32, (1, tile_n), 1)
        row = step * tile_n + jax.lax.broadcasted_iota(jnp.int32, (tile_n, 1), 0)
        batch_ids = jnp.where(col < n_nodes, batch_ids, -1)
        x_tile = jnp.where(row < n_nodes, x_tile, 0)

    # One-hot built directly in [b_pad, tile_n] (graphs on sublanes, nodes on
    # lanes): feeds the MXU in its natural [M, K] @ [K, N] layout, no transpose.
    gids = jax.lax.broadcasted_iota(jnp.int32, (b_pad, tile_n), 0)
    onehot = (gids == batch_ids).astype(jnp.float32)             # [b_pad, tile_n]

    # Per-graph node counts: XLU lane reduce, effectively free under the DMA.
    cnt_ref[...] += jnp.sum(onehot, axis=-1, keepdims=True)

    # Segment-sum on the MXU (bf16 operands, exact f32 accumulation in VMEM scratch).
    acc_ref[...] += jnp.dot(onehot.astype(compute_dtype),
                            x_tile.astype(compute_dtype),
                            preferred_element_type=jnp.float32)

    @pl.when(step == pl.num_programs(0) - 1)
    def _finalize():
        # mean pool; empty / padded graph rows clamp count to 1 -> output = bias.
        inv = pl.reciprocal(jnp.maximum(cnt_ref[...], 1.0), approx=True)
        mean = acc_ref[...] * inv                                # [b_pad, num_in] f32
        # dropout: module is in eval mode -> identity.
        y = jnp.dot(mean.astype(w_ref.dtype), w_ref[...],
                    preferred_element_type=jnp.float32) + b_ref[...]
        out_ref[...] = y.astype(out_ref.dtype)


def graph_pooling_forward(x, batch, weight, bias, num_graphs, *,
                          tile_n=None, compute_dtype=jnp.bfloat16,
                          target_block_bytes=2 * 1024 * 1024):
    """GraphPooling('mean') forward pass.

    x:      [N, num_in] float32 node features
    batch:  [N] int32 graph assignment per node (values in [0, num_graphs))
    weight: [num_in, num_out]  (transpose of PyTorch nn.Linear.weight)
    bias:   [num_out]
    """
    n_nodes, num_in = x.shape
    num_out = weight.shape[1]

    b_pad = _round_up(max(num_graphs, 1), 8)        # graphs -> sublane multiple
    f_out_pad = _round_up(num_out, 128)             # out features -> lane multiple

    # Byte-targeted node tile: size against the lane-padded x block (last dim is
    # padded to 128 lanes in VMEM) plus the [b_pad, tile_n] one-hot temporary.
    if tile_n is None:
        lane_in = _round_up(num_in, 128)
        bytes_per_node = lane_in * x.dtype.itemsize + b_pad * 4
        tile_n = max(128, target_block_bytes // bytes_per_node)
    if tile_n >= n_nodes:
        tile_n = n_nodes                            # single full-extent block (always legal)
    else:
        tile_n = max(128, (tile_n // 128) * 128)    # lane/sublane aligned

    grid = (pl.cdiv(n_nodes, tile_n),)

    # x is streamed as-is (no wrapper pad/cast pass); batch as a lane-dense row.
    batch_row = batch.astype(jnp.int32).reshape(1, n_nodes)
    # W / bias are tiny: pad out-features to a lane multiple; W in bf16 halves
    # its HBM fetch and (double-buffered) VMEM footprint, accumulation stays f32.
    w_p = jnp.pad(weight, ((0, 0), (0, f_out_pad - num_out))).astype(compute_dtype)
    b_p = jnp.pad(bias.astype(jnp.float32),
                  (0, f_out_pad - num_out)).reshape(1, f_out_pad)

    kernel = functools.partial(_graph_pool_kernel, n_nodes=n_nodes,
                               compute_dtype=compute_dtype)

    out_padded = pl.pallas_call(
        kernel,
        out_shape=jax.ShapeDtypeStruct((b_pad, f_out_pad), jnp.float32),
        grid=grid,
        in_specs=[
            pl.BlockSpec((1, tile_n), lambda i: (0, i)),           # batch ids row
            pl.BlockSpec((tile_n, num_in), lambda i: (i, 0)),      # x tile
            pl.BlockSpec((num_in, f_out_pad), lambda i: (0, 0)),   # W (bf16)
            pl.BlockSpec((1, f_out_pad), lambda i: (0, 0)),        # bias
        ],
        out_specs=pl.BlockSpec((b_pad, f_out_pad), lambda i: (0, 0)),
        scratch_shapes=[pltpu.VMEM((b_pad, num_in), jnp.float32),  # segment-sum acc
                        pltpu.VMEM((b_pad, 1), jnp.float32)],      # per-graph counts
        compiler_params=pltpu.CompilerParams(
            # node axis reduces into the resident scratch accumulator
            dimension_semantics=("arbitrary",),
            # safe scoped-VMEM limit for v5e/v6e/v7x; tiles here stay well under it
            vmem_limit_bytes=32 * 1024 * 1024,
        ),
    )(batch_row, x, w_p, b_p)

    # Slice off the graph / feature padding.
    return out_padded[:num_graphs, :num_out]


def _reference(x, batch, weight, bias, num_graphs, compute_dtype=jnp.float32):
    """Pure-JAX reference (global_mean_pool -> Linear).  With compute_dtype=bf16
    it mimics the kernel's quantization of x / mean / W (accumulation stays f32)."""
    cast = lambda a: a.astype(compute_dtype).astype(jnp.float32)
    onehot = (batch[:, None] == jnp.arange(num_graphs)[None, :]).astype(jnp.float32)
    pooled = jnp.dot(onehot.T, cast(x), precision=jax.lax.Precision.HIGHEST)
    counts = jnp.maximum(onehot.sum(0)[:, None], 1.0)
    mean = pooled / counts
    return jnp.dot(cast(mean), cast(weight),
                   precision=jax.lax.Precision.HIGHEST) + bias[None, :]


if __name__ == "__main__":
    key = jax.random.PRNGKey(0)
    k_x, k_w, k_b = jax.random.split(key, 3)

    # Small shapes consistent with the module; ragged node count exercises the
    # masked partial tail block.
    n_nodes, num_in, num_out, num_graphs = 300, 32, 16, 4

    x = jax.random.normal(k_x, (n_nodes, num_in), dtype=jnp.float32)
    # sorted, roughly balanced graph assignment (75 nodes per graph)
    batch = ((jnp.arange(n_nodes, dtype=jnp.int32) * num_graphs) // n_nodes).astype(jnp.int32)

    # PyTorch-style Linear init: uniform(-1/sqrt(fan_in), 1/sqrt(fan_in))
    bound = 1.0 / (num_in ** 0.5)
    weight = jax.random.uniform(k_w, (num_in, num_out), jnp.float32, -bound, bound)
    bias = jax.random.uniform(k_b, (num_out,), jnp.float32, -bound, bound)

    # Multi-step path: tile_n=128 -> 3 grid steps (last one partial / masked).
    out_tiled = graph_pooling_forward(x, batch, weight, bias, num_graphs, tile_n=128)
    # Byte-targeted default path (single full-extent block at this size).
    out_auto = graph_pooling_forward(x, batch, weight, bias, num_graphs)
    out_tiled, out_auto = jax.block_until_ready((out_tiled, out_auto))
    assert out_tiled.shape == (num_graphs, num_out)
    assert out_auto.shape == (num_graphs, num_out)

    # Check against a reference that applies the same bf16 quantization chain.
    ref_q = _reference(x, batch, weight, bias, num_graphs, compute_dtype=jnp.bfloat16)
    assert jnp.allclose(out_tiled, ref_q, atol=5e-3, rtol=5e-3), \
        float(jnp.max(jnp.abs(out_tiled - ref_q)))
    assert jnp.allclose(out_auto, ref_q, atol=5e-3, rtol=5e-3), \
        float(jnp.max(jnp.abs(out_auto - ref_q)))

    # Loose sanity check against the pure-f32 reference.
    ref_f32 = _reference(x, batch, weight, bias, num_graphs)
    assert jnp.allclose(out_tiled, ref_f32, atol=2e-2, rtol=2e-2)
    assert jnp.allclose(out_auto, ref_f32, atol=2e-2, rtol=2e-2)

    print("KERNEL_OK")
</pallas_src>

<mosaic_0001>
module attributes {stable_mosaic.version = 11 : i64} {
  func.func @_graph_pool_kernel(%arg0: i32, %arg1: memref<1x128xi32, #tpu.memory_space<vmem>>, %arg2: memref<128x32xf32, #tpu.memory_space<vmem>>, %arg3: memref<32x128xbf16, #tpu.memory_space<vmem>>, %arg4: memref<1x128xf32, #tpu.memory_space<vmem>>, %arg5: memref<8x128xf32, #tpu.memory_space<vmem>>, %arg6: memref<8x32xf32, #tpu.memory_space<vmem>>, %arg7: memref<8x1xf32, #tpu.memory_space<vmem>>) attributes {dimension_semantics = [#tpu.dimension_semantics<arbitrary>], iteration_bounds = array<i64: 3>, scalar_prefetch = 0 : i64, scratch_operands = 2 : i64, tpu.core_type = #tpu.core_type<tc>, window_params = [{transform_indices = @transform_0, window_bounds = array<i64: 1, 128>}, {transform_indices = @transform_1, window_bounds = array<i64: 128, 32>}, {pipeline_mode = #tpu.pipeline_mode<synchronous>, transform_indices = @transform_2, window_bounds = array<i64: 32, 128>}, {pipeline_mode = #tpu.pipeline_mode<synchronous>, transform_indices = @transform_3, window_bounds = array<i64: 1, 128>}, {pipeline_mode = #tpu.pipeline_mode<synchronous>, transform_indices = @transform_4, window_bounds = array<i64: 8, 128>}]} {
    %c0_i32 = arith.constant 0 : i32
    %0 = arith.cmpi eq, %arg0, %c0_i32 : i32
    %1 = arith.extui %0 : i1 to i32
    %c0_i32_0 = arith.constant 0 : i32
    %2 = arith.cmpi ne, %1, %c0_i32_0 : i32
    scf.if %2 {
      %cst_17 = arith.constant 0.000000e+00 : f32
      %43 = vector.broadcast %cst_17 : f32 to vector<8x32xf32>
      %c0_18 = arith.constant 0 : index
      %c0_19 = arith.constant 0 : index
      %44 = vector.load %arg6[%c0_18, %c0_19] : memref<8x32xf32, #tpu.memory_space<vmem>>, vector<8x32xf32>
      tpu.vector_store %arg6[%c0_18, %c0_19], %43 {strides = array<i32>} : memref<8x32xf32, #tpu.memory_space<vmem>>, vector<8x32xf32>,
      %cst_20 = arith.constant 0.000000e+00 : f32
      %45 = vector.broadcast %cst_20 : f32 to vector<8x1xf32>
      %c0_21 = arith.constant 0 : index
      %c0_22 = arith.constant 0 : index
      %46 = vector.load %arg7[%c0_21, %c0_22] : memref<8x1xf32, #tpu.memory_space<vmem>>, vector<8x1xf32>
      tpu.vector_store %arg7[%c0_21, %c0_22], %45 {strides = array<i32>} : memref<8x1xf32, #tpu.memory_space<vmem>>, vector<8x1xf32>,
    } else {
    }
    %c0 = arith.constant 0 : index
    %c0_1 = arith.constant 0 : index
    %3 = vector.load %arg1[%c0, %c0_1] : memref<1x128xi32, #tpu.memory_space<vmem>>, vector<1x128xi32>
    %c0_2 = arith.constant 0 : index
    %c0_3 = arith.constant 0 : index
    %4 = vector.load %arg2[%c0_2, %c0_3] : memref<128x32xf32, #tpu.memory_space<vmem>>, vector<128x32xf32>
    %c128_i32 = arith.constant 128 : i32
    %5 = arith.muli %arg0, %c128_i32 : i32
    %6 = tpu.iota {dimensions = array<i32: 1>} : vector<1x128xi32>
    %7 = vector.broadcast %5 : i32 to vector<1x128xi32>
    %8 = arith.addi %7, %6 : vector<1x128xi32>
    %c128_i32_4 = arith.constant 128 : i32
    %9 = arith.muli %arg0, %c128_i32_4 : i32
    %10 = tpu.iota {dimensions = array<i32: 0>} : vector<128x1xi32>
    %11 = vector.broadcast %9 : i32 to vector<128x1xi32>
    %12 = arith.addi %11, %10 : vector<128x1xi32>
    %c300_i32 = arith.constant 300 : i32
    %13 = vector.broadcast %c300_i32 : i32 to vector<1x128xi32>
    %14 = arith.cmpi slt, %8, %13 : vector<1x128xi32>
    %c-1_i32 = arith.constant -1 : i32
    %15 = vector.broadcast %c-1_i32 : i32 to vector<1x128xi32>
    %16 = arith.select %14, %3, %15 : vector<1x128xi1>, vector<1x128xi32>
    %c300_i32_5 = arith.constant 300 : i32
    %17 = vector.broadcast %c300_i32_5 : i32 to vector<128x1xi32>
    %18 = arith.cmpi slt, %12, %17 : vector<128x1xi32>
    %c0_i32_6 = arith.constant 0 : i32
    %19 = arith.sitofp %c0_i32_6 : i32 to f32
    %20 = vector.shape_cast %18 : vector<128x1xi1> to vector<128x1xi1>
    %21 = vector.broadcast %20 : vector<128x1xi1> to vector<128x32xi1>
    %22 = vector.broadcast %19 : f32 to vector<128x32xf32>
    %23 = arith.select %21, %4, %22 : vector<128x32xi1>, vector<128x32xf32>
    %24 = tpu.iota {dimensions = array<i32: 0>} : vector<8x128xi32>
    %25 = vector.broadcast %16 : vector<1x128xi32> to vector<8x128xi32>
    %26 = arith.cmpi eq, %24, %25 : vector<8x128xi32>
    %27 = arith.extui %26 : vector<8x128xi1> to vector<8x128xi32>
    %28 = arith.sitofp %27 : vector<8x128xi32> to vector<8x128xf32>
    %c0_7 = arith.constant 0 : index
    %c0_8 = arith.constant 0 : index
    %29 = vector.load %arg7[%c0_7, %c0_8] : memref<8x1xf32, #tpu.memory_space<vmem>>, vector<8x1xf32>
    %cst = arith.constant dense<0.000000e+00> : vector<8xf32>
    %30 = vector.multi_reduction <add>, %28, %cst [1] : vector<8x128xf32> to vector<8xf32>
    %31 = vector.shape_cast %30 : vector<8xf32> to vector<8x1xf32>
    %32 = arith.addf %29, %31 : vector<8x1xf32>
    %c0_9 = arith.constant 0 : index
    %c0_10 = arith.constant 0 : index
    %33 = vector.load %arg7[%c0_9, %c0_10] : memref<8x1xf32, #tpu.memory_space<vmem>>, vector<8x1xf32>
    tpu.vector_store %arg7[%c0_9, %c0_10], %32 {strides = array<i32>} : memref<8x1xf32, #tpu.memory_space<vmem>>, vector<8x1xf32>,
    %c0_11 = arith.constant 0 : index
    %c0_12 = arith.constant 0 : index
    %34 = vector.load %arg6[%c0_11, %c0_12] : memref<8x32xf32, #tpu.memory_space<vmem>>, vector<8x32xf32>
    %35 = arith.truncf %28 : vector<8x128xf32> to vector<8x128xbf16>
    %36 = arith.truncf %23 : vector<128x32xf32> to vector<128x32xbf16>
    %cst_13 = arith.constant dense<0.000000e+00> : vector<8x32xf32>
    %37 = tpu.matmul %35, %36, %cst_13 {dimension_numbers = #tpu.dot_dimension_numbers<[1], [0], [0], [1], [0, 0, 1, 1], [], []>} : vector<8x128xbf16>, vector<128x32xbf16>, vector<8x32xf32> -> vector<8x32xf32>
    %38 = arith.addf %34, %37 : vector<8x32xf32>
    %c0_14 = arith.constant 0 : index
    %c0_15 = arith.constant 0 : index
    %39 = vector.load %arg6[%c0_14, %c0_15] : memref<8x32xf32, #tpu.memory_space<vmem>>, vector<8x32xf32>
    tpu.vector_store %arg6[%c0_14, %c0_15], %38 {strides = array<i32>} : memref<8x32xf32, #tpu.memory_space<vmem>>, vector<8x32xf32>,
    %c2_i32 = arith.constant 2 : i32
    %40 = arith.cmpi eq, %arg0, %c2_i32 : i32
    %41 = arith.extui %40 : i1 to i32
    %c0_i32_16 = arith.constant 0 : i32
    %42 = arith.cmpi ne, %41, %c0_i32_16 : i32
    scf.if %42 {
      %c0_17 = arith.constant 0 : index
      %c0_18 = arith.constant 0 : index
      %43 = vector.load %arg7[%c0_17, %c0_18] : memref<8x1xf32, #tpu.memory_space<vmem>>, vector<8x1xf32>
      %cst_19 = arith.constant 1.000000e+00 : f32
      %44 = vector.broadcast %cst_19 : f32 to vector<8x1xf32>
      %45 = arith.maximumf %43, %44 : vector<8x1xf32>
      %46 = tpu.reciprocal %45 {approx = true} : vector<8x1xf32> -> vector<8x1xf32>
      %c0_20 = arith.constant 0 : index
      %c0_21 = arith.constant 0 : index
      %47 = vector.load %arg6[%c0_20, %c0_21] : memref<8x32xf32, #tpu.memory_space<vmem>>, vector<8x32xf32>
      %48 = vector.broadcast %46 : vector<8x1xf32> to vector<8x32xf32>
      %49 = arith.mulf %47, %48 : vector<8x32xf32>
      %50 = arith.truncf %49 : vector<8x32xf32> to vector<8x32xbf16>
      %c0_22 = arith.constant 0 : index
      %c0_23 = arith.constant 0 : index
      %51 = vector.load %arg3[%c0_22, %c0_23] : memref<32x128xbf16, #tpu.memory_space<vmem>>, vector<32x128xbf16>
      %cst_24 = arith.constant dense<0.000000e+00> : vector<8x128xf32>
      %52 = tpu.matmul %50, %51, %cst_24 {dimension_numbers = #tpu.dot_dimension_numbers<[1], [0], [0], [1], [0, 0, 1, 1], [], []>} : vector<8x32xbf16>, vector<32x128xbf16>, vector<8x128xf32> -> vector<8x128xf32>
      %c0_25 = arith.constant 0 : index
      %c0_26 = arith.constant 0 : index
      %53 = vector.load %arg4[%c0_25, %c0_26] : memref<1x128xf32, #tpu.memory_space<vmem>>, vector<1x128xf32>
      %54 = vector.broadcast %53 : vector<1x128xf32> to vector<8x128xf32>
      %55 = arith.addf %52, %54 : vector<8x128xf32>
      %c0_27 = arith.constant 0 : index
      %c0_28 = arith.constant 0 : index
      %56 = vector.load %arg5[%c0_27, %c0_28] : memref<8x128xf32, #tpu.memory_space<vmem>>, vector<8x128xf32>
      tpu.vector_store %arg5[%c0_27, %c0_28], %55 {strides = array<i32>} : memref<8x128xf32, #tpu.memory_space<vmem>>, vector<8x128xf32>,
    } else {
    }
    return
  }
  func.func @transform_0(%arg0: i32) -> (i32, i32) {
    %c0_i32 = arith.constant 0 : i32
    %c0_i32_0 = arith.constant 0 : i32
    return %c0_i32, %arg0 : i32, i32
  }
  func.func @transform_1(%arg0: i32) -> (i32, i32) {
    %c0_i32 = arith.constant 0 : i32
    %c0_i32_0 = arith.constant 0 : i32
    return %arg0, %c0_i32 : i32, i32
  }
  func.func @transform_2(%arg0: i32) -> (i32, i32) {
    %c0_i32 = arith.constant 0 : i32
    %c0_i32_0 = arith.constant 0 : i32
    %c0_i32_1 = arith.constant 0 : i32
    return %c0_i32, %c0_i32_0 : i32, i32
  }
  func.func @transform_3(%arg0: i32) -> (i32, i32) {
    %c0_i32 = arith.constant 0 : i32
    %c0_i32_0 = arith.constant 0 : i32
    %c0_i32_1 = arith.constant 0 : i32
    return %c0_i32, %c0_i32_0 : i32, i32
  }
  func.func @transform_4(%arg0: i32) -> (i32, i32) {
    %c0_i32 = arith.constant 0 : i32
    %c0_i32_0 = arith.constant 0 : i32
    %c0_i32_1 = arith.constant 0 : i32
    return %c0_i32, %c0_i32_0 : i32, i32
  }
}

</mosaic_0001>

<llo_original>
// kernel: tpu_custom_call.1
$region0: #{tpu_custom_call.1}
  #allocation0 [shape = 'u32[]', space=smem, size = 0x4, offset = 0x4, fixed_abs, tag = 'smem constant byte address 0x4 - core index']
  #allocation1 [shape = 'u32[144,128]{1,0:T(1,128)}', space=vmem, size = 0x12000, scoped, tag = 'internal scratch']
  #allocation2 [shape = 'f32[8,32]{1,0:T(8,128)}', space=vmem, size = 0x1000, scoped, tag = 'scratch operand']
  #allocation3 [shape = 'f32[8,1]{1,0:T(8,128)}', space=vmem, size = 0x1000, scoped, tag = 'scratch operand']
  %s0 = inlined_call_operand.vmem [shape: s32[1,300], index: 0, kind: input, shape index: {}]
  %s1 = inlined_call_operand.vmem [shape: f32[300,32], index: 1, kind: input, shape index: {}]
  %s2 = inlined_call_operand.vmem [shape: bf16[32,128], index: 2, kind: input, shape index: {}]
  %s3 = inlined_call_operand.vmem [shape: f32[1,128], index: 3, kind: input, shape index: {}]
  %s4 = inlined_call_operand.hbm [shape: f32[8,128], index: 4, kind: output, shape index: {}]
  %s5 = sld [smem:[#allocation0]]
  $region57: #{tpu_custom_call.1} parent=0
    _
  %s7 = ssub.s32 1, %s5
  %s8 = scalar_select 0, %s7, %s5
  $region1: #{tpu_custom_call.1} parent=0
    #allocation4 [shape = 'u8[4096]{0}', space=vmem, size = 0x1000, scoped, tag = 'output window, operand 0, single buffered']
    #allocation5 [shape = 's32[2]{0}', space=sflag, size = 0x8, scoped, tag = 'scoped memory for tpu_custom_call.1']
    %9 = vsyncpa [#allocation5], 0
    loop: start=0, step=1, limit=5
    $region2: #{tpu_custom_call.1} parent=1 // loop_pre_header
      _
    $region3: #{tpu_custom_call.1} parent=1 // loop_header
      %s11 = sphi 0, %s15
      %p12 = scmp.ge.s32.totalorder %s11, 5
      %s21 = sphi 0, %s23
      %s24 = sphi 0, %s21
      %s25 = sphi 0, %s24
      %s41 = sphi 0, %s25
      %s47 = sphi 0, %s49
      %s50 = sphi 0, %s47
      %s51 = sphi 0, %s50
      %s67 = sphi 0, %s51
      %s71 = sphi 0, %s71
      %s73 = sphi 0, %s71
      %s74 = sphi 0, %s73
      %s88 = sphi 0, %s74
      %s92 = sphi 0, %s92
      %s94 = sphi 0, %s92
      %s95 = sphi 0, %s94
      %s109 = sphi 0, %s95
      %s113 = sphi 0, %s113
      %s115 = sphi 0, %s113
      %s116 = sphi 0, %s115
      %s130 = sphi 0, %s116
    $region4: #{tpu_custom_call.1} parent=1 // loop_header_branch
      %14 = sbr.rel (%p12) target = $region8
    $region5: #{tpu_custom_call.1} parent=1 // loop_body
      %s16 = ssub.s32 %s11, 1
      %s17 = ssub.s32 %s11, 2
      %s18 = sadd.s32 %s11, 1
      %s19 = ssub.s32 %s11, %s18
      %p20 = scmp.eq.s32.totalorder %s19, 0
      %s22 = sadd.s32 %s21, 1
      %s23 = scalar_select %p20, %s21, %s22
      %p26 = pneg %p20
      %p27 = scmp.eq.s32.totalorder %s11, 2
      %p28 = por %p26, %p27
      %p29 = scmp.ne.s32.totalorder %s21, %s24
      %p30 = scmp.eq.s32.totalorder %s11, 0
      %p31 = por %p29, %p30
      %p32 = scmp.ne.s32.totalorder %s21, %s24
      %p33 = scmp.eq.s32.totalorder %s16, 2
      %p34 = por %p32, %p33
      %p35 = scmp.ne.s32.totalorder %s24, %s25
      %p36 = scmp.eq.s32.totalorder %s16, 0
      %p37 = por %p35, %p36
      %p38 = scmp.ne.s32.totalorder %s24, %s25
      %p39 = scmp.eq.s32.totalorder %s17, 2
      %p40 = por %p38, %p39
      %p42 = scmp.ne.s32.totalorder %s25, %s41
      %p43 = scmp.eq.s32.totalorder %s17, 0
      %p44 = por %p42, %p43
      %s45 = ssub.s32 %s11, %s18
      %p46 = scmp.eq.s32.totalorder %s45, 0
      %s48 = sadd.s32 %s47, 1
      %s49 = scalar_select %p46, %s47, %s48
      %p52 = pneg %p46
      %p53 = scmp.eq.s32.totalorder %s11, 2
      %p54 = por %p52, %p53
      %p55 = scmp.ne.s32.totalorder %s47, %s50
      %p56 = scmp.eq.s32.totalorder %s11, 0
      %p57 = por %p55, %p56
      %p58 = scmp.ne.s32.totalorder %s47, %s50
      %p59 = scmp.eq.s32.totalorder %s16, 2
      %p60 = por %p58, %p59
      %p61 = scmp.ne.s32.totalorder %s50, %s51
      %p62 = scmp.eq.s32.totalorder %s16, 0
      %p63 = por %p61, %p62
      %p64 = scmp.ne.s32.totalorder %s50, %s51
      %p65 = scmp.eq.s32.totalorder %s17, 2
      %p66 = por %p64, %p65
      %p68 = scmp.ne.s32.totalorder %s51, %s67
      %p69 = scmp.eq.s32.totalorder %s17, 0
      %p70 = por %p68, %p69
      %s72 = sadd.s32 %s71, 1
      %p75 = scmp.eq.s32.totalorder %s11, 2
      %p76 = scmp.ne.s32.totalorder %s71, %s73
      %p77 = scmp.eq.s32.totalorder %s11, 0
      %p78 = por %p76, %p77
      %p79 = scmp.ne.s32.totalorder %s71, %s73
      %p80 = scmp.eq.s32.totalorder %s16, 2
      %p81 = por %p79, %p80
      %p82 = scmp.ne.s32.totalorder %s73, %s74
      %p83 = scmp.eq.s32.totalorder %s16, 0
      %p84 = por %p82, %p83
      %p85 = scmp.ne.s32.totalorder %s73, %s74
      %p86 = scmp.eq.s32.totalorder %s17, 2
      %p87 = por %p85, %p86
      %p89 = scmp.ne.s32.totalorder %s74, %s88
      %p90 = scmp.eq.s32.totalorder %s17, 0
      %p91 = por %p89, %p90
      %s93 = sadd.s32 %s92, 1
      %p96 = scmp.eq.s32.totalorder %s11, 2
      %p97 = scmp.ne.s32.totalorder %s92, %s94
      %p98 = scmp.eq.s32.totalorder %s11, 0
      %p99 = por %p97, %p98
      %p100 = scmp.ne.s32.totalorder %s92, %s94
      %p101 = scmp.eq.s32.totalorder %s16, 2
      %p102 = por %p100, %p101
      %p103 = scmp.ne.s32.totalorder %s94, %s95
      %p104 = scmp.eq.s32.totalorder %s16, 0
      %p105 = por %p103, %p104
      %p106 = scmp.ne.s32.totalorder %s94, %s95
      %p107 = scmp.eq.s32.totalorder %s17, 2
      %p108 = por %p106, %p107
      %p110 = scmp.ne.s32.totalorder %s95, %s109
      %p111 = scmp.eq.s32.totalorder %s17, 0
      %p112 = por %p110, %p111
      %s114 = sadd.s32 %s113, 1
      %p117 = scmp.eq.s32.totalorder %s11, 2
      %p118 = scmp.ne.s32.totalorder %s113, %s115
      %p119 = scmp.eq.s32.totalorder %s11, 0
      %p120 = por %p118, %p119
      %p121 = scmp.ne.s32.totalorder %s113, %s115
      %p122 = scmp.eq.s32.totalorder %s16, 2
      %p123 = por %p121, %p122
      %p124 = scmp.ne.s32.totalorder %s115, %s116
      %p125 = scmp.eq.s32.totalorder %s16, 0
      %p126 = por %p124, %p125
      %p127 = scmp.ne.s32.totalorder %s115, %s116
      %p128 = scmp.eq.s32.totalorder %s17, 2
      %p129 = por %p127, %p128
      %p131 = scmp.ne.s32.totalorder %s116, %s130
      %p132 = scmp.eq.s32.totalorder %s17, 0
      %p133 = por %p131, %p132
      %p134 = scmp.le.s32.totalorder 1, %s11
      %p135 = scmp.lt.s32.totalorder %s11, 4
      %p136 = pnand %p134, %p135
      %p137 = pneg %p136
      // Predicated region
      $region9: #{tpu_custom_call.1} parent=5 // pred_check
        _
      $region10: #{tpu_custom_call.1} parent=5 // pred_check_branch
        %139 = sbr.rel (%p136) target = $region12
      $region11: #{tpu_custom_call.1} parent=5 // pred_region
        %s140 = ssub.s32 %s11, 1
        // Predicated region
        $region13: #{tpu_custom_call.1} parent=11 // pred_check
          %p141 = pneg %p84
        $region14: #{tpu_custom_call.1} parent=11 // pred_check_branch
          %143 = sbr.rel (%p141) target = $region16
        $region15: #{tpu_custom_call.1} parent=11 // pred_region
          _
        $region16: #{tpu_custom_call.1} parent=11 // pred_fallthru
          _
        // Predicated region
        $region17: #{tpu_custom_call.1} parent=11 // pred_check
          %p144 = pneg %p105
        $region18: #{tpu_custom_call.1} parent=11 // pred_check_branch
          %146 = sbr.rel (%p144) target = $region20
        $region19: #{tpu_custom_call.1} parent=11 // pred_region
          _
        $region20: #{tpu_custom_call.1} parent=11 // pred_fallthru
          _
      $region12: #{tpu_custom_call.1} parent=5 // pred_fallthru
        _
      %p147 = scmp.lt.s32.totalorder %s11, 3
      // Predicated region
      $region21: #{tpu_custom_call.1} parent=5 // pred_check
        %p148 = pneg %p147
      $region22: #{tpu_custom_call.1} parent=5 // pred_check_branch
        %150 = sbr.rel (%p148) target = $region24
      $region23: #{tpu_custom_call.1} parent=5 // pred_region
        // Predicated region
        $region25: #{tpu_custom_call.1} parent=23 // pred_check
          %p151 = pneg %p31
        $region26: #{tpu_custom_call.1} parent=23 // pred_check_branch
          %153 = sbr.rel (%p151) target = $region28
        $region27: #{tpu_custom_call.1} parent=23 // pred_region
          %p154 = scmp.lt.s32.totalorder %s11, 2
          %s155 = scalar_select %p154, %s11, 2
          %s156 = scalar_lea.vmem %s0, %s155
        $region28: #{tpu_custom_call.1} parent=23 // pred_fallthru
          _
        // Predicated region
        $region29: #{tpu_custom_call.1} parent=23 // pred_check
          %p157 = pneg %p57
        $region30: #{tpu_custom_call.1} parent=23 // pred_check_branch
          %159 = sbr.rel (%p157) target = $region32
        $region31: #{tpu_custom_call.1} parent=23 // pred_region
          %s160 = smul.u32 16, %s11
          %s161 = ssub.s32 38, %s160
          %p162 = scmp.lt.s32.totalorder %s161, 16
          %s163 = scalar_select %p162, %s161, 16
          %s164 = smul.u32 128, %s163
          %p165 = scmp.lt.s32.totalorder %s160, 37
          %s166 = scalar_select %p165, %s160, 37
          %s167 = smul.addr %s166, 8
          %s168 = scalar_lea.vmem %s1, %s167
          %s169 = smul.u32 16, %s11
          %s170 = ssub.s32 38, %s169
          %p171 = scmp.lt.s32.totalorder %s170, 16
          %s172 = scalar_select %p171, %s170, 16
          %s173 = smul.u32 128, %s172
        $region32: #{tpu_custom_call.1} parent=23 // pred_fallthru
          _
      $region24: #{tpu_custom_call.1} parent=5 // pred_fallthru
        _
      %p174 = scmp.le.s32.totalorder 1, %s11
      %p175 = scmp.lt.s32.totalorder %s11, 4
      %p176 = pnand %p174, %p175
      %p177 = pneg %p176
      // Predicated region
      $region33: #{tpu_custom_call.1} parent=5 // pred_check
        _
      $region34: #{tpu_custom_call.1} parent=5 // pred_check_branch
        %179 = sbr.rel (%p176) target = $region36
      $region35: #{tpu_custom_call.1} parent=5 // pred_region
        %s180 = ssub.s32 %s11, 1
        %p181 = scmp.lt.s32.totalorder %s16, 2
        %s182 = scalar_select %p181, %s16, 2
        %s183 = scalar_lea.vmem %s0, %s182
        %p184 = pneg %p37
        %p185 = pneg %p34
        %s186 = smul.u32 16, %s16
        %s187 = ssub.s32 38, %s186
        %p188 = scmp.lt.s32.totalorder %s187, 16
        %s189 = scalar_select %p188, %s187, 16
        %s190 = smul.u32 128, %s189
        %p191 = scmp.lt.s32.totalorder %s186, 37
        %s192 = scalar_select %p191, %s186, 37
        %s193 = smul.addr %s192, 8
        %s194 = scalar_lea.vmem %s1, %s193
        %p195 = pneg %p63
        %p196 = pneg %p60
        %p197 = pneg %p84
        %p198 = pneg %p81
        %p199 = pneg %p105
        %p200 = pneg %p102
        %p201 = pneg %p126
        %p202 = pneg %p123
        %p203 = scmp.lt.s32.totalorder %s16, 2
        %s204 = scalar_select %p203, %s16, 2
        %s205 = scalar_lea.vmem %s0, %s204
        %s206 = smul.u32 16, %s16
        %s207 = ssub.s32 38, %s206
        %p208 = scmp.lt.s32.totalorder %s207, 16
        %s209 = scalar_select %p208, %s207, 16
        %s210 = smul.u32 128, %s209
        %p211 = scmp.lt.s32.totalorder %s206, 37
        %s212 = scalar_select %p211, %s206, 37
        %s213 = smul.addr %s212, 8
        %s214 = scalar_lea.vmem %s1, %s213
        %s215 = smul.u32 16, %s16
        %s216 = ssub.s32 38, %s215
        %p217 = scmp.lt.s32.totalorder %s216, 16
        %s218 = scalar_select %p217, %s216, 16
        %s219 = smul.u32 128, %s218
        %p221 = scmp.eq.s32.totalorder %s16, 0
        // Predicated region
        $region37: #{tpu_custom_call.1} parent=35 // pred_check
          %p222 = pneg %p221
        $region38: #{tpu_custom_call.1} parent=35 // pred_check_branch
          %224 = sbr.rel (%p222) target = $region40
        $region39: #{tpu_custom_call.1} parent=35 // pred_region
          %vm225 = vcmask 261120
          %226 = vst.msk [vmem:[#allocation2] sm:$0xff] %vm225, 0.0
          %vm227 = vcmask 7168
          %228 = vst.msk [vmem:[#allocation3] sm:$0xff] %vm227, 0.0
        $region40: #{tpu_custom_call.1} parent=35 // pred_fallthru
          _
        %v229 = vld [vmem:[%s205] sm:$0x1]
        %v230 = vld [vmem:[%s214] sm:$0xff]
        %v231 = vld [vmem:[%s214 + $0x8] sm:$0xff]
        %v232 = vld [vmem:[%s214 + $0x10] sm:$0xff]
        %v233 = vld [vmem:[%s214 + $0x18] sm:$0xff]
        %v234 = vld [vmem:[%s214 + $0x20] sm:$0xff]
        %v235 = vld [vmem:[%s214 + $0x28] sm:$0xff]
        %v236 = vld [vmem:[%s214 + $0x30] sm:$0xff]
        %v237 = vld [vmem:[%s214 + $0x38] sm:$0xff]
        %v238 = vld [vmem:[%s214 + $0x40] sm:$0xff]
        %v239 = vld [vmem:[%s214 + $0x48] sm:$0xff]
        %v240 = vld [vmem:[%s214 + $0x50] sm:$0xff]
        %v241 = vld [vmem:[%s214 + $0x58] sm:$0xff]
        %v242 = vld [vmem:[%s214 + $0x60] sm:$0xff]
        %v243 = vld [vmem:[%s214 + $0x68] sm:$0xff]
        %v244 = vld [vmem:[%s214 + $0x70] sm:$0xff]
        %v245 = vld [vmem:[%s214 + $0x78] sm:$0xff]
        %s246 = smul.u32 %s16, 128
        %v247 = vlaneseq
        %v248 = vand.u32 %v247, 127
        %v249 = vstv %s246
        %v250 = vadd.s32 %v249, %v248
        %v251 = vlaneseq
        %v252 = vshrl.u32 %v251, 7
        %v253 = vadd.s32 %v252, 8
        %v254 = vadd.s32 %v252, 16
        %v255 = vadd.s32 %v252, 24
        %v256 = vadd.s32 %v252, 32
        %v257 = vadd.s32 %v252, 40
        %v258 = vadd.s32 %v252, 48
        %v259 = vadd.s32 %v252, 56
        %v260 = vadd.s32 %v252, 64
        %v261 = vadd.s32 %v252, 72
        %v262 = vadd.s32 %v252, 80
        %v263 = vadd.s32 %v252, 88
        %v264 = vadd.s32 %v252, 96
        %v265 = vadd.s32 %v252, 104
        %v266 = vadd.s32 %v252, 112
        %v267 = vadd.s32 %v252, 120
        %v268 = vadd.s32 %v249, %v252
        %v269 = vadd.s32 %v249, %v253
        %v270 = vadd.s32 %v249, %v254
        %v271 = vadd.s32 %v249, %v255
        %v272 = vadd.s32 %v249, %v256
        %v273 = vadd.s32 %v249, %v257
        %v274 = vadd.s32 %v249, %v258
        %v275 = vadd.s32 %v249, %v259
        %v276 = vadd.s32 %v249, %v260
        %v277 = vadd.s32 %v249, %v261
        %v278 = vadd.s32 %v249, %v262
        %v279 = vadd.s32 %v249, %v263
        %v280 = vadd.s32 %v249, %v264
        %v281 = vadd.s32 %v249, %v265
        %v282 = vadd.s32 %v249, %v266
        %v283 = vadd.s32 %v249, %v267
        %vm284 = vcmp.lt.s32.totalorder %v250, 300
        %v285 = vsel %vm284, %v229, 4294967295
        %vm286 = vcmp.lt.s32.totalorder %v268, 300
        %vm287 = vcmp.lt.s32.totalorder %v269, 300
        %vm288 = vcmp.lt.s32.totalorder %v270, 300
        %vm289 = vcmp.lt.s32.totalorder %v271, 300
        %vm290 = vcmp.lt.s32.totalorder %v272, 300
        %vm291 = vcmp.lt.s32.totalorder %v273, 300
        %vm292 = vcmp.lt.s32.totalorder %v274, 300
        %vm293 = vcmp.lt.s32.totalorder %v275, 300
        %vm294 = vcmp.lt.s32.totalorder %v276, 300
        %vm295 = vcmp.lt.s32.totalorder %v277, 300
        %vm296 = vcmp.lt.s32.totalorder %v278, 300
        %vm297 = vcmp.lt.s32.totalorder %v279, 300
        %vm298 = vcmp.lt.s32.totalorder %v280, 300
        %vm299 = vcmp.lt.s32.totalorder %v281, 300
        %vm300 = vcmp.lt.s32.totalorder %v282, 300
        %vm301 = vcmp.lt.s32.totalorder %v283, 300
        %v302 = vsel %vm286, 1, 0
        %v303 = vsel %vm287, 1, 0
        %v304 = vsel %vm288, 1, 0
        %v305 = vsel %vm289, 1, 0
        %v306 = vsel %vm290, 1, 0
        %v307 = vsel %vm291, 1, 0
        %v308 = vsel %vm292, 1, 0
        %v309 = vsel %vm293, 1, 0
        %v310 = vsel %vm294, 1, 0
        %v311 = vsel %vm295, 1, 0
        %v312 = vsel %vm296, 1, 0
        %v313 = vsel %vm297, 1, 0
        %v314 = vsel %vm298, 1, 0
        %v315 = vsel %vm299, 1, 0
        %v316 = vsel %vm300, 1, 0
        %v317 = vsel %vm301, 1, 0
        %vm318 = vcmp.eq.s32.totalorder %v302, 1
        %vm319 = vcmp.eq.s32.totalorder %v303, 1
        %vm320 = vcmp.eq.s32.totalorder %v304, 1
        %vm321 = vcmp.eq.s32.totalorder %v305, 1
        %vm322 = vcmp.eq.s32.totalorder %v306, 1
        %vm323 = vcmp.eq.s32.totalorder %v307, 1
        %vm324 = vcmp.eq.s32.totalorder %v308, 1
        %vm325 = vcmp.eq.s32.totalorder %v309, 1
        %vm326 = vcmp.eq.s32.totalorder %v310, 1
        %vm327 = vcmp.eq.s32.totalorder %v311, 1
        %vm328 = vcmp.eq.s32.totalorder %v312, 1
        %vm329 = vcmp.eq.s32.totalorder %v313, 1
        %vm330 = vcmp.eq.s32.totalorder %v314, 1
        %vm331 = vcmp.eq.s32.totalorder %v315, 1
        %vm332 = vcmp.eq.s32.totalorder %v316, 1
        %vm333 = vcmp.eq.s32.totalorder %v317, 1
        %v334 = vsel %vm318, %v230, 0.0
        %v335 = vsel %vm319, %v231, 0.0
        %v336 = vsel %vm320, %v232, 0.0
        %v337 = vsel %vm321, %v233, 0.0
        %v338 = vsel %vm322, %v234, 0.0
        %v339 = vsel %vm323, %v235, 0.0
        %v340 = vsel %vm324, %v236, 0.0
        %v341 = vsel %vm325, %v237, 0.0
        %v342 = vsel %vm326, %v238, 0.0
        %v343 = vsel %vm327, %v239, 0.0
        %v344 = vsel %vm328, %v240, 0.0
        %v345 = vsel %vm329, %v241, 0.0
        %v346 = vsel %vm330, %v242, 0.0
        %v347 = vsel %vm331, %v243, 0.0
        %v348 = vsel %vm332, %v244, 0.0
        %v349 = vsel %vm333, %v245, 0.0
        %v350 = vlaneseq
        %v351 = vshrl.u32 %v350, 7
        %v352 = vsub.s32 0, %v351
        %v353 = vrot.slane %v285, %v352
        %vm354 = vcmp.eq.s32.totalorder %v252, %v353
        %v355 = vsel %vm354, 1, 0
        %v356 = vcvt.s32.f32 %v355
        %v357 = vld [vmem:[#allocation3] sm:$0xff]
        %358 = vadd.xlane.f32.xlu0 %v356
        %v359 = vpop.xlane.xlu0 %358
        %v360 = vadd.f32 %v357, %v359
        %vm361 = vcmask 7168
        %362 = vst.msk [vmem:[#allocation3] sm:$0xff] %vm361, %v360
        %v363 = vld [vmem:[#allocation2] sm:$0xff]
        %v364 = vpack.c.bf16 %v356, %v356
        %v365 = vpack.c.bf16 %v335, %v334
        %v366 = vpack.c.bf16 %v337, %v336
        %v367 = vpack.c.bf16 %v339, %v338
        %v368 = vpack.c.bf16 %v341, %v340
        %v369 = vpack.c.bf16 %v343, %v342
        %v370 = vpack.c.bf16 %v345, %v344
        %v371 = vpack.c.bf16 %v347, %v346
        %v372 = vpack.c.bf16 %v349, %v348
        %373 = vmatprep.subr.bf16.mxu0 0
        %374 = vmatpush1.bf16.msra.mxu0 %v365
        %375 = vmatprep.subr.bf16.mxu0 0
        %376 = vmatpush1.bf16.msra.mxu0 %v366
        %377 = vmatprep.subr.bf16.mxu0 0
        %378 = vmatpush1.bf16.msra.mxu0 %v367
        %379 = vmatprep.subr.bf16.mxu0 0
        %380 = vmatpush1.bf16.msra.mxu0 %v368
        %381 = vmatprep.subr.bf16.mxu0 0
        %382 = vmatpush1.bf16.msra.mxu0 %v369
        %383 = vmatprep.subr.bf16.mxu0 0
        %384 = vmatpush1.bf16.msra.mxu0 %v370
        %385 = vmatprep.subr.bf16.mxu0 0
        %386 = vmatpush1.bf16.msra.mxu0 %v371
        %387 = vmatprep.subr.bf16.mxu0 0
        %388 = vmatpush1.bf16.msra.mxu0 %v372
        %389 = vmatprep.subr.bf16.mxu0 0
        %390 = vmatpush1.bf16.msra.mxu0 0
        %391 = vmatprep.subr.bf16.mxu0 0
        %392 = vmatpush1.bf16.msra.mxu0 0
        %393 = vmatprep.subr.bf16.mxu0 0
        %394 = vmatpush1.bf16.msra.mxu0 0
        %395 = vmatprep.subr.bf16.mxu0 0
        %396 = vmatpush1.bf16.msra.mxu0 0
        %397 = vmatprep.subr.bf16.mxu0 0
        %398 = vmatpush1.bf16.msra.mxu0 0
        %399 = vmatprep.subr.bf16.mxu0 0
        %400 = vmatpush1.bf16.msra.mxu0 0
        %401 = vmatprep.subr.bf16.mxu0 0
        %402 = vmatpush1.bf16.msra.mxu0 0
        %403 = vmatprep.subr.bf16.mxu0 0
        %404 = vmatpush1.bf16.msra.mxu0 0
        %405 = vmatprep.mubr.bf16.mxu0 0
        %406 = vmatmul.mubr.bf16.gmra.mrb[0].mxu0 %v364
        %v407 = vpop.f32.mrb[0].mxu0
        %v408 = vadd.f32 0.0, %v407
        %v409 = vpop.f32.mrb[0].mxu0
        %v410 = vpop.f32.mrb[0].mxu0
        %v411 = vpop.f32.mrb[0].mxu0
        %412 = vdwg.mxu0
        %v413 = vadd.f32 %v363, %v408
        %vm414 = vcmask 261120
        %415 = vst.msk [vmem:[#allocation2] sm:$0xff] %vm414, %v413
        %p416 = scmp.eq.s32.totalorder %s16, 2
        // Predicated region
        $region41: #{tpu_custom_call.1} parent=35 // pred_check
          %p417 = pneg %p416
        $region42: #{tpu_custom_call.1} parent=35 // pred_check_branch
          %419 = sbr.rel (%p417) target = $region44
        $region43: #{tpu_custom_call.1} parent=35 // pred_region
          %v420 = vld [vmem:[#allocation3] sm:$0xff]
          %v421 = vmax.f32 %v420, 1.0
          %v422 = vrcp.pop %v421
          %v423 = vld [vmem:[#allocation2] sm:$0xff]
          %425 = vset.pattern.permute.xlu0 0
          %426 = vperm.xlu0 %425, %v422
          %v427 = vpop.permute.xlu0 %426
          %v429 = vmul.f32 %v423, %v427
          %v430 = vpack.c.bf16 %v429, %v429
          %v431 = vld [vmem:[%s2] sm:$0xf]
          %v432 = vld [vmem:[%s2 + $0x4] sm:$0xf]
          %v433 = vld [vmem:[%s2 + $0x8] sm:$0xf]
          %v434 = vld [vmem:[%s2 + $0xc] sm:$0xf]
          %v435 = vld [vmem:[%s3] sm:$0x1]
          %v437 = vlaneseq
          %v438 = vshrl.u32 %v437, 7
          %v439 = vsub.s32 0, %v438
          %v440 = vrot.slane %v435, %v439
          %v446 = vunpack.c.l.b16 %v431
          %v447 = vunpack.c.l.b16 %v432
          %v448 = vunpack.c.l.b16 %v433
          %v449 = vunpack.c.l.b16 %v434
          %v450 = vpack.c.b16 %v447, %v446
          %v451 = vpack.c.b16 %v449, %v448
          %v455 = vsel %vm414, %v430, 0
          %457 = vmatprep.subr.bf16.mxu0 0
          %458 = vmatpush1.bf16.msra.mxu0 %v450
          %459 = vmatprep.subr.bf16.mxu0 0
          %460 = vmatpush1.bf16.msra.mxu0 %v451
          %461 = vmatprep.subr.bf16.mxu0 0
          %462 = vmatpush1.bf16.msra.mxu0 0
          %463 = vmatprep.subr.bf16.mxu0 0
          %464 = vmatpush1.bf16.msra.mxu0 0
          %465 = vmatprep.subr.bf16.mxu0 0
          %466 = vmatpush1.bf16.msra.mxu0 0
          %467 = vmatprep.subr.bf16.mxu0 0
          %468 = vmatpush1.bf16.msra.mxu0 0
          %469 = vmatprep.subr.bf16.mxu0 0
          %470 = vmatpush1.bf16.msra.mxu0 0
          %471 = vmatprep.subr.bf16.mxu0 0
          %472 = vmatpush1.bf16.msra.mxu0 0
          %473 = vmatprep.subr.bf16.mxu0 0
          %474 = vmatpush1.bf16.msra.mxu0 0
          %475 = vmatprep.subr.bf16.mxu0 0
          %476 = vmatpush1.bf16.msra.mxu0 0
          %477 = vmatprep.subr.bf16.mxu0 0
          %478 = vmatpush1.bf16.msra.mxu0 0
          %479 = vmatprep.subr.bf16.mxu0 0
          %480 = vmatpush1.bf16.msra.mxu0 0
          %481 = vmatprep.subr.bf16.mxu0 0
          %482 = vmatpush1.bf16.msra.mxu0 0
          %483 = vmatprep.subr.bf16.mxu0 0
          %484 = vmatpush1.bf16.msra.mxu0 0
          %485 = vmatprep.subr.bf16.mxu0 0
          %486 = vmatpush1.bf16.msra.mxu0 0
          %487 = vmatprep.subr.bf16.mxu0 0
          %488 = vmatpush1.bf16.msra.mxu0 0
          %489 = vmatprep.mubr.bf16.mxu0 0
          %490 = vmatmul.mubr.bf16.gmra.mrb[0].mxu0 %v455
          %v491 = vpop.f32.mrb[0].mxu0
          %v492 = vadd.f32 %v440, %v491
          %v493 = vpop.f32.mrb[0].mxu0
          %v494 = vpop.f32.mrb[0].mxu0
          %v495 = vpop.f32.mrb[0].mxu0
          %496 = vdwg.mxu0
          %497 = vst [vmem:[#allocation4] sm:$0xff] %v492
        $region44: #{tpu_custom_call.1} parent=35 // pred_fallthru
          _
        // Predicated region
        $region45: #{tpu_custom_call.1} parent=35 // pred_check
          %p498 = pneg %p123
        $region46: #{tpu_custom_call.1} parent=35 // pred_check_branch
          %500 = sbr.rel (%p498) target = $region48
        $region47: #{tpu_custom_call.1} parent=35 // pred_region
          %s502 = ssub.s32 128, 128
          %503 = vsyncadd [#allocation5], %s502
          %s505 = sshll.u32 [#allocation4], 4
          %s506 = int_to_ptr.vmem [resolvable:$true] %s505
          %508 = dma.vmem_to_hbm [thread:$0]  %s506, 128, %s4, [#allocation5]
        $region48: #{tpu_custom_call.1} parent=35 // pred_fallthru
          _
        // Predicated region
        $region49: #{tpu_custom_call.1} parent=35 // pred_check
          %p509 = pneg %p123
        $region50: #{tpu_custom_call.1} parent=35 // pred_check_branch
          %511 = sbr.rel (%p509) target = $region52
        $region51: #{tpu_custom_call.1} parent=35 // pred_region
          %512 = dma.done [#allocation5], 128
        $region52: #{tpu_custom_call.1} parent=35 // pred_fallthru
          _
      $region36: #{tpu_custom_call.1} parent=5 // pred_fallthru
        _
      %p513 = scmp.le.s32.totalorder 2, %s11
      // Predicated region
      $region53: #{tpu_custom_call.1} parent=5 // pred_check
        %p514 = pneg %p513
      $region54: #{tpu_custom_call.1} parent=5 // pred_check_branch
        %516 = sbr.rel (%p514) target = $region56
      $region55: #{tpu_custom_call.1} parent=5 // pred_region
        %s517 = ssub.s32 %s11, 2
      $region56: #{tpu_custom_call.1} parent=5 // pred_fallthru
        _
    $region6: #{tpu_custom_call.1} parent=1 // loop_footer
      %s15 = sadd.s32 1, %s11
    $region7: #{tpu_custom_call.1} parent=1 // loop_footer_branch
      %10 = sbr.rel target = $region3
    $region8: #{tpu_custom_call.1} parent=1 // loop_exit
      _
    %518 = vsyncpa [#allocation5], 1
    %s519 = scalar_lea.sflag [#allocation5], 1
    %520 = vsyncpa %s519, 1

</llo_original>
